<compile_context>
chip_gen: v5e
topology: v5e:2x2
jax: 0.10.0
libtpu: 0.0.40
codegen_flags: <defaults>
</compile_context>

<pallas_src>
import functools

import jax
import jax.numpy as jnp
from jax.experimental import pallas as pl
from jax.experimental.pallas import tpu as pltpu

BN_EPS = 1e-5


def _round_up(n, m):
    return ((n + m - 1) // m) * m


def _vmem_capacity_bytes():
    """Physical VMEM of the local TPU (64 MiB on v7x, 128 MiB on v5e/v6e)."""
    try:
        cap = getattr(pltpu.get_tpu_info(), "vmem_capacity_bytes", None)
        if cap:
            return int(cap)
    except Exception:
        pass
    return 64 * 1024 * 1024   # conservative default


# ---------------------------------------------------------------------------
# Tiled two-pass kernel: grid = (2 passes, n batch tiles).
#   pass 0: h = relu(x @ w1 + b1); accumulate sum(h), sum(h^2); optionally
#           cache h into a persistent VMEM slab.
#   pass 1: finalize BN stats once and fold them into the ln2 weights, then
#           per tile: logits = sum(h * w2s, -1) + c ; y = sigmoid(logits).
# ---------------------------------------------------------------------------
def _disc_tiled_kernel(x_ref, w1_ref, b1_ref, gamma_ref, beta_ref, w2_ref,
                       b2_ref, y_ref, sum_ref, ssq_ref, w2s_ref, c_ref, *rest,
                       n_pad_rows, inv_true_b, approx_sigmoid):
    cache_h = bool(rest)
    h_cache_ref = rest[0] if cache_h else None

    pass_idx = pl.program_id(0)   # 0: accumulate BN stats, 1: normalize + ln2
    tile_idx = pl.program_id(1)   # batch tile

    def _ln1_relu():
        h = jnp.dot(x_ref[...], w1_ref[...],
                    preferred_element_type=jnp.float32)
        return jnp.maximum(h + b1_ref[...], 0.0)            # (tile_b, H) f32

    if not cache_h:
        # Recompute fallback: h is needed by both passes (x streamed twice).
        h_both = _ln1_relu()

    @pl.when(pass_idx == 0)
    def _pass0():
        @pl.when(tile_idx == 0)
        def _init():
            sum_ref[...] = jnp.zeros_like(sum_ref)
            ssq_ref[...] = jnp.zeros_like(ssq_ref)

        h = _ln1_relu() if cache_h else h_both
        if cache_h:
            h_cache_ref[tile_idx] = h
        # Padded rows are NOT masked here; their constant contribution
        # (they equal relu(b1) since the padded x rows are zero) is
        # subtracted once at the start of pass 1.
        sum_ref[...] += jnp.sum(h, axis=0, keepdims=True)
        ssq_ref[...] += jnp.sum(h * h, axis=0, keepdims=True)

    @pl.when(pass_idx == 1)
    def _pass1():
        @pl.when(tile_idx == 0)
        def _finalize_stats():
            s = sum_ref[...]
            ss = ssq_ref[...]
            if n_pad_rows:                       # static Python constant
                r = jnp.maximum(b1_ref[...], 0.0)
                s = s - n_pad_rows * r
                ss = ss - n_pad_rows * (r * r)
            mean = s * inv_true_b                               # (1, H)
            # One-pass variance; the clamp guards tiny cancellation negatives
            # (fine post-ReLU at unit-scale activations).
            var = jnp.maximum(ss * inv_true_b - mean * mean, 0.0)
            inv_std = jax.lax.rsqrt(var + BN_EPS)
            scale = gamma_ref[...] * inv_std                    # (1, H)
            shift = beta_ref[...] - mean * scale                # (1, H)
            # Fold BN into ln2: logits = sum(h*(w2*scale)) + (sum(shift*w2)+b2)
            w2s_ref[...] = w2_ref[...] * scale
            c_ref[...] = (jnp.sum(shift * w2_ref[...], axis=1, keepdims=True)
                          + b2_ref[...])

        h = h_cache_ref[tile_idx] if cache_h else h_both
        # N=1 head on VPU multiply + XLU lane reduce (no padded MXU tile).
        logits = jnp.sum(h * w2s_ref[...], axis=1, keepdims=True) + c_ref[...]
        # sigmoid: exp on the EUP; approx=True also sends the reciprocal there.
        y = pl.reciprocal(1.0 + jnp.exp(-logits), approx=approx_sigmoid)
        y_ref[...] = y.astype(y_ref.dtype)


# Single-invocation fast path: the whole (padded) batch resident in VMEM.
def _disc_small_kernel(x_ref, w1_ref, b1_ref, gamma_ref, beta_ref, w2_ref,
                       b2_ref, y_ref, *, n_pad_rows, inv_true_b,
                       approx_sigmoid):
    h = jnp.dot(x_ref[...], w1_ref[...], preferred_element_type=jnp.float32)
    h = jnp.maximum(h + b1_ref[...], 0.0)
    s = jnp.sum(h, axis=0, keepdims=True)
    ss = jnp.sum(h * h, axis=0, keepdims=True)
    if n_pad_rows:
        r = jnp.maximum(b1_ref[...], 0.0)
        s = s - n_pad_rows * r
        ss = ss - n_pad_rows * (r * r)
    mean = s * inv_true_b
    var = jnp.maximum(ss * inv_true_b - mean * mean, 0.0)
    inv_std = jax.lax.rsqrt(var + BN_EPS)
    scale = gamma_ref[...] * inv_std
    shift = beta_ref[...] - mean * scale
    w2s = w2_ref[...] * scale
    c = jnp.sum(shift * w2_ref[...], axis=1, keepdims=True) + b2_ref[...]
    logits = jnp.sum(h * w2s, axis=1, keepdims=True) + c
    y = pl.reciprocal(1.0 + jnp.exp(-logits), approx=approx_sigmoid)
    y_ref[...] = y.astype(y_ref.dtype)


def discriminator_forward(x, w1, b1, gamma, beta, w2, b2, *, tile_b=None,
                          cache_h=None, approx_sigmoid=False):
    """x: (B, D_in) -> (B, 1) f32.  w1: (D_in, H), w2: (H, 1)."""
    B, D_in = x.shape
    H = w1.shape[1]

    align = 16 if x.dtype == jnp.bfloat16 else 8   # bf16 sublane packing
    xsize = x.dtype.itemsize
    wsize = w1.dtype.itemsize

    cap = _vmem_capacity_bytes()
    # Scoped-VMEM request: leave headroom for compiler-internal scratch.
    budget = min(max(cap - 24 * 1024 * 1024, 32 * 1024 * 1024),
                 100 * 1024 * 1024)

    # 1-D params as lane-major (1, N) tiles; w2 stored as a (1, H) row so the
    # N=1 head runs on the VPU/XLU.
    f32 = jnp.float32
    b1_2d = b1.reshape(1, H).astype(f32)
    gamma_2d = gamma.reshape(1, H).astype(f32)
    beta_2d = beta.reshape(1, H).astype(f32)
    w2_row = w2.reshape(1, H).astype(f32)
    b2_2d = b2.reshape(1, 1).astype(f32)

    # ---------------- small-problem fast path (single grid step) -----------
    if tile_b is None:
        b_pad = _round_up(B, align)
        est = (2 * b_pad * D_in * xsize        # x (double-buffer safety)
               + 2 * D_in * H * wsize          # w1
               + 4 * b_pad * H * 4             # h + elementwise temporaries
               + 2 * b_pad * 4                 # y
               + 16 * H * 4)                   # small params
        if b_pad <= 1024 and est <= budget // 2:
            x_p = jnp.pad(x, ((0, b_pad - B), (0, 0))) if b_pad != B else x
            kernel = functools.partial(
                _disc_small_kernel, n_pad_rows=float(b_pad - B),
                inv_true_b=1.0 / B, approx_sigmoid=approx_sigmoid)
            full = lambda shape: pl.BlockSpec(shape, lambda i: (0, 0))
            y_pad = pl.pallas_call(
                kernel,
                out_shape=jax.ShapeDtypeStruct((b_pad, 1), jnp.float32),
                grid=(1,),
                in_specs=[full((b_pad, D_in)), full((D_in, H)), full((1, H)),
                          full((1, H)), full((1, H)), full((1, H)),
                          full((1, 1))],
                out_specs=full((b_pad, 1)),
                compiler_params=pltpu.CompilerParams(
                    dimension_semantics=("arbitrary",),
                    vmem_limit_bytes=budget),
            )(x_p, w1, b1_2d, gamma_2d, beta_2d, w2_row, b2_2d)
            return y_pad[:B]

    # ---------------- tiled two-pass path -----------------------------------
    if tile_b is None:
        tile_b = 1024 if budget >= (64 << 20) else 512
    tile_b = max(align, _round_up(tile_b, align))
    tile_b = min(tile_b, _round_up(B, align))

    def _per_tile_bytes(tb):
        # double-buffered x + y tiles, plus (tb, H) f32 elementwise temps
        return 2 * tb * (D_in * xsize + 4) + 4 * tb * H * 4

    fixed = 2 * D_in * H * wsize + 16 * H * 4 + (1 << 15)  # w1 + params + slack
    while fixed + _per_tile_bytes(tile_b) > budget and tile_b > align:
        new_tile = max(align, ((tile_b // 2) // align) * align)
        if new_tile == tile_b:
            break
        tile_b = new_tile

    b_pad = _round_up(B, tile_b)
    n_tiles = b_pad // tile_b

    if cache_h is None:
        # Cache the (b_pad, H) activation slab iff it fits the budget; else
        # fall back to recomputing ln1 in pass 1 (x streamed twice).
        cache_h = (fixed + _per_tile_bytes(tile_b) + b_pad * H * 4) <= budget

    if b_pad != B:
        x = jnp.pad(x, ((0, b_pad - B), (0, 0)))

    kernel = functools.partial(
        _disc_tiled_kernel, n_pad_rows=float(b_pad - B), inv_true_b=1.0 / B,
        approx_sigmoid=approx_sigmoid)

    pinned = lambda shape: pl.BlockSpec(shape, lambda p, t: (0, 0))
    if cache_h:
        # Pass 1 never reads x; pin its block index there so it is not
        # re-streamed (one stale re-fetch of block 0 at the pass boundary).
        x_map = lambda p, t: (t * (1 - p), 0)
    else:
        x_map = lambda p, t: (t, 0)

    scratch = [pltpu.VMEM((1, H), jnp.float32),   # sum(h)   over the batch
               pltpu.VMEM((1, H), jnp.float32),   # sum(h^2) over the batch
               pltpu.VMEM((1, H), jnp.float32),   # w2 * gamma/std (BN folded)
               pltpu.VMEM((1, 1), jnp.float32)]   # sum(shift*w2) + b2
    if cache_h:
        scratch.append(pltpu.VMEM((n_tiles, tile_b, H), jnp.float32))

    y_pad = pl.pallas_call(
        kernel,
        out_shape=jax.ShapeDtypeStruct((b_pad, 1), jnp.float32),
        grid=(2, n_tiles),            # (pass, batch tile); pass is outermost
        in_specs=[
            pl.BlockSpec((tile_b, D_in), x_map),  # x
            pinned((D_in, H)),        # w1 (resident across the whole grid)
            pinned((1, H)),           # b1
            pinned((1, H)),           # gamma
            pinned((1, H)),           # beta
            pinned((1, H)),           # w2 row
            pinned((1, 1)),           # b2
        ],
        # The output is only written in pass 1.  With this map every output
        # block's visits are consecutive in grid order (block 0 spans all of
        # pass 0 plus step (1,0)), so each block is written back exactly once
        # with its pass-1 value under current revisit semantics.
        out_specs=pl.BlockSpec((tile_b, 1), lambda p, t: (t * p, 0)),
        scratch_shapes=scratch,
        compiler_params=pltpu.CompilerParams(
            # Both axes carry cross-iteration scratch state (global BN stats,
            # optional h cache), so neither can be megacore-"parallel".
            dimension_semantics=("arbitrary", "arbitrary"),
            vmem_limit_bytes=budget,
        ),
    )(x, w1, b1_2d, gamma_2d, beta_2d, w2_row, b2_2d)

    return y_pad[:B]


def _reference_forward(x, w1, b1, gamma, beta, w2, b2):
    x = x.astype(jnp.float32)
    w1 = w1.astype(jnp.float32)
    h = jnp.maximum(x @ w1 + b1, 0.0)
    mean = jnp.mean(h, axis=0, keepdims=True)
    var = jnp.mean((h - mean) ** 2, axis=0, keepdims=True)
    hn = (h - mean) / jnp.sqrt(var + BN_EPS) * gamma + beta
    return jax.nn.sigmoid(hn @ w2 + b2)


if __name__ == "__main__":
    # Small shapes consistent with the module (input_dim / hidden_dim scaled
    # down).  B is deliberately NOT a multiple of the tile so padded-row stat
    # correction and multi-tile global BN statistics are exercised.
    B, D_IN, HID = 100, 64, 32
    TILE_B = 32                    # -> grid = (2, 4); last tile has 4 valid rows

    key = jax.random.PRNGKey(0)
    kx, kw1, kb1, kw2, kb2 = jax.random.split(key, 5)

    x = jax.random.normal(kx, (B, D_IN), dtype=jnp.float32)

    # PyTorch-style Linear init: U(-1/sqrt(fan_in), 1/sqrt(fan_in)).
    lim1 = 1.0 / (D_IN ** 0.5)
    w1 = jax.random.uniform(kw1, (D_IN, HID), jnp.float32, -lim1, lim1)
    b1 = jax.random.uniform(kb1, (HID,), jnp.float32, -lim1, lim1)

    lim2 = 1.0 / (HID ** 0.5)
    w2 = jax.random.uniform(kw2, (HID, 1), jnp.float32, -lim2, lim2)
    b2 = jax.random.uniform(kb2, (1,), jnp.float32, -lim2, lim2)

    # BatchNorm1d affine params at PyTorch default init.
    gamma = jnp.ones((HID,), jnp.float32)
    beta = jnp.zeros((HID,), jnp.float32)

    y_ref = _reference_forward(x, w1, b1, gamma, beta, w2, b2)

    # --- 1) small-problem fast path (single grid step, whole batch in VMEM) -
    y_fast = discriminator_forward(x, w1, b1, gamma, beta, w2, b2)
    y_fast = jax.block_until_ready(y_fast)
    assert y_fast.shape == (B, 1)
    assert jnp.allclose(y_fast, y_ref, atol=2e-5, rtol=2e-5), (
        float(jnp.max(jnp.abs(y_fast - y_ref))))

    # --- 2) tiled path with the VMEM h cache (pass 1 skips the matmul) ------
    y_cached = discriminator_forward(x, w1, b1, gamma, beta, w2, b2,
                                     tile_b=TILE_B, cache_h=True)
    y_cached = jax.block_until_ready(y_cached)
    assert jnp.allclose(y_cached, y_ref, atol=2e-5, rtol=2e-5), (
        float(jnp.max(jnp.abs(y_cached - y_ref))))

    # --- 3) tiled recompute fallback (h does not persist; x streamed twice) -
    y_recomp = discriminator_forward(x, w1, b1, gamma, beta, w2, b2,
                                     tile_b=TILE_B, cache_h=False)
    y_recomp = jax.block_until_ready(y_recomp)
    assert jnp.allclose(y_recomp, y_ref, atol=2e-5, rtol=2e-5), (
        float(jnp.max(jnp.abs(y_recomp - y_ref))))

    # --- 4) bf16 matmul inputs (f32 MXU accumulation, valid on v5e/v6e/v7x)
    # --- plus EUP approx-reciprocal sigmoid (looser tolerance). -------------
    y_bf16 = discriminator_forward(
        x.astype(jnp.bfloat16), w1.astype(jnp.bfloat16), b1, gamma, beta,
        w2, b2, tile_b=TILE_B, approx_sigmoid=True)
    y_bf16 = jax.block_until_ready(y_bf16)
    y_ref_bf16 = _reference_forward(
        x.astype(jnp.bfloat16), w1.astype(jnp.bfloat16), b1, gamma, beta,
        w2, b2)
    assert jnp.allclose(y_bf16, y_ref_bf16, atol=1e-2, rtol=1e-2)

    print("KERNEL_OK")
</pallas_src>

<mosaic_0001>
module attributes {stable_mosaic.version = 11 : i64} {
  func.func @_disc_small_kernel(%arg0: i32, %arg1: memref<104x64xf32, #tpu.memory_space<vmem>>, %arg2: memref<64x32xf32, #tpu.memory_space<vmem>>, %arg3: memref<1x32xf32, #tpu.memory_space<vmem>>, %arg4: memref<1x32xf32, #tpu.memory_space<vmem>>, %arg5: memref<1x32xf32, #tpu.memory_space<vmem>>, %arg6: memref<1x32xf32, #tpu.memory_space<vmem>>, %arg7: memref<1x1xf32, #tpu.memory_space<vmem>>, %arg8: memref<104x1xf32, #tpu.memory_space<vmem>>) attributes {dimension_semantics = [#tpu.dimension_semantics<arbitrary>], iteration_bounds = array<i64: 1>, scalar_prefetch = 0 : i64, scratch_operands = 0 : i64, tpu.core_type = #tpu.core_type<tc>, window_params = [{pipeline_mode = #tpu.pipeline_mode<synchronous>, transform_indices = @transform_0, window_bounds = array<i64: 104, 64>}, {pipeline_mode = #tpu.pipeline_mode<synchronous>, transform_indices = @transform_1, window_bounds = array<i64: 64, 32>}, {pipeline_mode = #tpu.pipeline_mode<synchronous>, transform_indices = @transform_2, window_bounds = array<i64: 1, 32>}, {pipeline_mode = #tpu.pipeline_mode<synchronous>, transform_indices = @transform_3, window_bounds = array<i64: 1, 32>}, {pipeline_mode = #tpu.pipeline_mode<synchronous>, transform_indices = @transform_4, window_bounds = array<i64: 1, 32>}, {pipeline_mode = #tpu.pipeline_mode<synchronous>, transform_indices = @transform_5, window_bounds = array<i64: 1, 32>}, {pipeline_mode = #tpu.pipeline_mode<synchronous>, transform_indices = @transform_6, window_bounds = array<i64: 1, 1>}, {pipeline_mode = #tpu.pipeline_mode<synchronous>, transform_indices = @transform_7, window_bounds = array<i64: 104, 1>}]} {
    %c0 = arith.constant 0 : index
    %c0_0 = arith.constant 0 : index
    %0 = vector.load %arg1[%c0, %c0_0] : memref<104x64xf32, #tpu.memory_space<vmem>>, vector<104x64xf32>
    %c0_1 = arith.constant 0 : index
    %c0_2 = arith.constant 0 : index
    %1 = vector.load %arg2[%c0_1, %c0_2] : memref<64x32xf32, #tpu.memory_space<vmem>>, vector<64x32xf32>
    %cst = arith.constant dense<0.000000e+00> : vector<104x32xf32>
    %2 = tpu.matmul %0, %1, %cst {dimension_numbers = #tpu.dot_dimension_numbers<[1], [0], [0], [1], [0, 0, 1, 1], [], []>} : vector<104x64xf32>, vector<64x32xf32>, vector<104x32xf32> -> vector<104x32xf32>
    %c0_3 = arith.constant 0 : index
    %c0_4 = arith.constant 0 : index
    %3 = vector.load %arg3[%c0_3, %c0_4] : memref<1x32xf32, #tpu.memory_space<vmem>>, vector<1x32xf32>
    %4 = vector.broadcast %3 : vector<1x32xf32> to vector<104x32xf32>
    %5 = arith.addf %2, %4 : vector<104x32xf32>
    %cst_5 = arith.constant 0.000000e+00 : f32
    %6 = vector.broadcast %cst_5 : f32 to vector<104x32xf32>
    %7 = arith.maximumf %5, %6 : vector<104x32xf32>
    %cst_6 = arith.constant dense<0.000000e+00> : vector<32xf32>
    %8 = vector.multi_reduction <add>, %7, %cst_6 [0] : vector<104x32xf32> to vector<32xf32>
    %9 = vector.shape_cast %8 : vector<32xf32> to vector<1x32xf32>
    %10 = arith.mulf %7, %7 : vector<104x32xf32>
    %cst_7 = arith.constant dense<0.000000e+00> : vector<32xf32>
    %11 = vector.multi_reduction <add>, %10, %cst_7 [0] : vector<104x32xf32> to vector<32xf32>
    %12 = vector.shape_cast %11 : vector<32xf32> to vector<1x32xf32>
    %c0_8 = arith.constant 0 : index
    %c0_9 = arith.constant 0 : index
    %13 = vector.load %arg3[%c0_8, %c0_9] : memref<1x32xf32, #tpu.memory_space<vmem>>, vector<1x32xf32>
    %cst_10 = arith.constant 0.000000e+00 : f32
    %14 = vector.broadcast %cst_10 : f32 to vector<1x32xf32>
    %15 = arith.maximumf %13, %14 : vector<1x32xf32>
    %cst_11 = arith.constant 4.000000e+00 : f32
    %16 = vector.broadcast %cst_11 : f32 to vector<1x32xf32>
    %17 = arith.mulf %16, %15 : vector<1x32xf32>
    %18 = arith.subf %9, %17 : vector<1x32xf32>
    %19 = arith.mulf %15, %15 : vector<1x32xf32>
    %cst_12 = arith.constant 4.000000e+00 : f32
    %20 = vector.broadcast %cst_12 : f32 to vector<1x32xf32>
    %21 = arith.mulf %20, %19 : vector<1x32xf32>
    %22 = arith.subf %12, %21 : vector<1x32xf32>
    %cst_13 = arith.constant 0.00999999977 : f32
    %23 = vector.broadcast %cst_13 : f32 to vector<1x32xf32>
    %24 = arith.mulf %18, %23 : vector<1x32xf32>
    %cst_14 = arith.constant 0.00999999977 : f32
    %25 = vector.broadcast %cst_14 : f32 to vector<1x32xf32>
    %26 = arith.mulf %22, %25 : vector<1x32xf32>
    %27 = arith.mulf %24, %24 : vector<1x32xf32>
    %28 = arith.subf %26, %27 : vector<1x32xf32>
    %cst_15 = arith.constant 0.000000e+00 : f32
    %29 = vector.broadcast %cst_15 : f32 to vector<1x32xf32>
    %30 = arith.maximumf %28, %29 : vector<1x32xf32>
    %cst_16 = arith.constant 9.99999974E-6 : f32
    %31 = vector.broadcast %cst_16 : f32 to vector<1x32xf32>
    %32 = arith.addf %30, %31 : vector<1x32xf32>
    %33 = math.rsqrt %32 : vector<1x32xf32>
    %c0_17 = arith.constant 0 : index
    %c0_18 = arith.constant 0 : index
    %34 = vector.load %arg4[%c0_17, %c0_18] : memref<1x32xf32, #tpu.memory_space<vmem>>, vector<1x32xf32>
    %35 = arith.mulf %34, %33 : vector<1x32xf32>
    %c0_19 = arith.constant 0 : index
    %c0_20 = arith.constant 0 : index
    %36 = vector.load %arg5[%c0_19, %c0_20] : memref<1x32xf32, #tpu.memory_space<vmem>>, vector<1x32xf32>
    %37 = arith.mulf %24, %35 : vector<1x32xf32>
    %38 = arith.subf %36, %37 : vector<1x32xf32>
    %c0_21 = arith.constant 0 : index
    %c0_22 = arith.constant 0 : index
    %39 = vector.load %arg6[%c0_21, %c0_22] : memref<1x32xf32, #tpu.memory_space<vmem>>, vector<1x32xf32>
    %40 = arith.mulf %39, %35 : vector<1x32xf32>
    %c0_23 = arith.constant 0 : index
    %c0_24 = arith.constant 0 : index
    %41 = vector.load %arg6[%c0_23, %c0_24] : memref<1x32xf32, #tpu.memory_space<vmem>>, vector<1x32xf32>
    %42 = arith.mulf %38, %41 : vector<1x32xf32>
    %cst_25 = arith.constant dense<0.000000e+00> : vector<1xf32>
    %43 = vector.multi_reduction <add>, %42, %cst_25 [1] : vector<1x32xf32> to vector<1xf32>
    %44 = vector.shape_cast %43 : vector<1xf32> to vector<1x1xf32>
    %c0_26 = arith.constant 0 : index
    %c0_27 = arith.constant 0 : index
    %45 = vector.load %arg7[%c0_26, %c0_27] : memref<1x1xf32, #tpu.memory_space<vmem>>, vector<1x1xf32>
    %46 = arith.addf %44, %45 : vector<1x1xf32>
    %47 = vector.broadcast %40 : vector<1x32xf32> to vector<104x32xf32>
    %48 = arith.mulf %7, %47 : vector<104x32xf32>
    %cst_28 = arith.constant dense<0.000000e+00> : vector<104xf32>
    %49 = vector.multi_reduction <add>, %48, %cst_28 [1] : vector<104x32xf32> to vector<104xf32>
    %50 = vector.shape_cast %49 : vector<104xf32> to vector<104x1xf32>
    %51 = vector.broadcast %46 : vector<1x1xf32> to vector<104x1xf32>
    %52 = arith.addf %50, %51 : vector<104x1xf32>
    %cst_29 = arith.constant 0.000000e+00 : f32
    %53 = vector.broadcast %cst_29 : f32 to vector<104x1xf32>
    %54 = arith.subf %53, %52 : vector<104x1xf32>
    %55 = math.exp %54 : vector<104x1xf32>
    %cst_30 = arith.constant 1.000000e+00 : f32
    %56 = vector.broadcast %cst_30 : f32 to vector<104x1xf32>
    %57 = arith.addf %56, %55 : vector<104x1xf32>
    %58 = tpu.reciprocal %57 : vector<104x1xf32> -> vector<104x1xf32>
    %c0_31 = arith.constant 0 : index
    %c0_32 = arith.constant 0 : index
    %59 = vector.load %arg8[%c0_31, %c0_32] : memref<104x1xf32, #tpu.memory_space<vmem>>, vector<104x1xf32>
    tpu.vector_store %arg8[%c0_31, %c0_32], %58 {strides = array<i32>} : memref<104x1xf32, #tpu.memory_space<vmem>>, vector<104x1xf32>,
    return
  }
  func.func @transform_0(%arg0: i32) -> (i32, i32) {
    %c0_i32 = arith.constant 0 : i32
    %c0_i32_0 = arith.constant 0 : i32
    %c0_i32_1 = arith.constant 0 : i32
    return %c0_i32, %c0_i32_0 : i32, i32
  }
  func.func @transform_1(%arg0: i32) -> (i32, i32) {
    %c0_i32 = arith.constant 0 : i32
    %c0_i32_0 = arith.constant 0 : i32
    %c0_i32_1 = arith.constant 0 : i32
    return %c0_i32, %c0_i32_0 : i32, i32
  }
  func.func @transform_2(%arg0: i32) -> (i32, i32) {
    %c0_i32 = arith.constant 0 : i32
    %c0_i32_0 = arith.constant 0 : i32
    %c0_i32_1 = arith.constant 0 : i32
    return %c0_i32, %c0_i32_0 : i32, i32
  }
  func.func @transform_3(%arg0: i32) -> (i32, i32) {
    %c0_i32 = arith.constant 0 : i32
    %c0_i32_0 = arith.constant 0 : i32
    %c0_i32_1 = arith.constant 0 : i32
    return %c0_i32, %c0_i32_0 : i32, i32
  }
  func.func @transform_4(%arg0: i32) -> (i32, i32) {
    %c0_i32 = arith.constant 0 : i32
    %c0_i32_0 = arith.constant 0 : i32
    %c0_i32_1 = arith.constant 0 : i32
    return %c0_i32, %c0_i32_0 : i32, i32
  }
  func.func @transform_5(%arg0: i32) -> (i32, i32) {
    %c0_i32 = arith.constant 0 : i32
    %c0_i32_0 = arith.constant 0 : i32
    %c0_i32_1 = arith.constant 0 : i32
    return %c0_i32, %c0_i32_0 : i32, i32
  }
  func.func @transform_6(%arg0: i32) -> (i32, i32) {
    %c0_i32 = arith.constant 0 : i32
    %c0_i32_0 = arith.constant 0 : i32
    %c0_i32_1 = arith.constant 0 : i32
    return %c0_i32, %c0_i32_0 : i32, i32
  }
  func.func @transform_7(%arg0: i32) -> (i32, i32) {
    %c0_i32 = arith.constant 0 : i32
    %c0_i32_0 = arith.constant 0 : i32
    %c0_i32_1 = arith.constant 0 : i32
    return %c0_i32, %c0_i32_0 : i32, i32
  }
}

</mosaic_0001>

<llo_original>
// kernel: tpu_custom_call.1
$region0: #{tpu_custom_call.1}
  #allocation0 [shape = 'u32[]', space=smem, size = 0x4, offset = 0x4, fixed_abs, tag = 'smem constant byte address 0x4 - core index']
  #allocation1 [shape = 'u32[72,128]{1,0:T(1,128)}', space=vmem, size = 0x9000, scoped, tag = 'internal scratch']
  #allocation2 [shape = 'f32[1,1]{1,0:T(1,128)S(1)}', space=vmem, size = 0x200, scoped, tag = 'scoped memory for tpu_custom_call.1']
  %s0 = inlined_call_operand.vmem [shape: f32[104,64], index: 0, kind: input, shape index: {}]
  %s1 = inlined_call_operand.vmem [shape: f32[64,32], index: 1, kind: input, shape index: {}]
  %s2 = inlined_call_operand.vmem [shape: f32[1,32], index: 2, kind: input, shape index: {}]
  %s3 = inlined_call_operand.vmem [shape: f32[1,32], index: 3, kind: input, shape index: {}]
  %s4 = inlined_call_operand.vmem [shape: f32[1,32], index: 4, kind: input, shape index: {}]
  %s5 = inlined_call_operand.vmem [shape: f32[1,32], index: 5, kind: input, shape index: {}]
  %s6 = inlined_call_operand.<no memory space> [shape: f32[1,1], index: 6, kind: input, shape index: {}]
  %s7 = inlined_call_operand.vmem [shape: f32[104,1], index: 7, kind: output, shape index: {}]
  %s8 = sld [smem:[#allocation0]]
  $region38: #{tpu_custom_call.1} parent=0
    _
  %s10 = ssub.s32 1, %s8
  %s11 = scalar_select 0, %s10, %s8
  %v12 = vstv %s6
  %13 = vst [vmem:[#allocation2] sm:$0x1] %v12
  // Predicated region
  $region2: #{tpu_custom_call.1} parent=0 // pred_check
    _
  $region3: #{tpu_custom_call.1} parent=0 // pred_check_branch
    %15 = sbr.rel (0) target = $region5
  $region4: #{tpu_custom_call.1} parent=0 // pred_region
    _
  $region5: #{tpu_custom_call.1} parent=0 // pred_fallthru
    _
  // Predicated region
  $region6: #{tpu_custom_call.1} parent=0 // pred_check
    _
  $region7: #{tpu_custom_call.1} parent=0 // pred_check_branch
    %17 = sbr.rel (0) target = $region9
  $region8: #{tpu_custom_call.1} parent=0 // pred_region
    _
  $region9: #{tpu_custom_call.1} parent=0 // pred_fallthru
    _
  // Predicated region
  $region10: #{tpu_custom_call.1} parent=0 // pred_check
    _
  $region11: #{tpu_custom_call.1} parent=0 // pred_check_branch
    %19 = sbr.rel (0) target = $region13
  $region12: #{tpu_custom_call.1} parent=0 // pred_region
    _
  $region13: #{tpu_custom_call.1} parent=0 // pred_fallthru
    _
  // Predicated region
  $region14: #{tpu_custom_call.1} parent=0 // pred_check
    _
  $region15: #{tpu_custom_call.1} parent=0 // pred_check_branch
    %21 = sbr.rel (0) target = $region17
  $region16: #{tpu_custom_call.1} parent=0 // pred_region
    _
  $region17: #{tpu_custom_call.1} parent=0 // pred_fallthru
    _
  // Predicated region
  $region18: #{tpu_custom_call.1} parent=0 // pred_check
    _
  $region19: #{tpu_custom_call.1} parent=0 // pred_check_branch
    %23 = sbr.rel (0) target = $region21
  $region20: #{tpu_custom_call.1} parent=0 // pred_region
    _
  $region21: #{tpu_custom_call.1} parent=0 // pred_fallthru
    _
  // Predicated region
  $region22: #{tpu_custom_call.1} parent=0 // pred_check
    _
  $region23: #{tpu_custom_call.1} parent=0 // pred_check_branch
    %25 = sbr.rel (0) target = $region25
  $region24: #{tpu_custom_call.1} parent=0 // pred_region
    _
  $region25: #{tpu_custom_call.1} parent=0 // pred_fallthru
    _
  // Predicated region
  $region26: #{tpu_custom_call.1} parent=0 // pred_check
    _
  $region27: #{tpu_custom_call.1} parent=0 // pred_check_branch
    %27 = sbr.rel (0) target = $region29
  $region28: #{tpu_custom_call.1} parent=0 // pred_region
    _
  $region29: #{tpu_custom_call.1} parent=0 // pred_fallthru
    _
  %v28 = vld [vmem:[%s0] sm:$0xff]
  %v29 = vld [vmem:[%s0 + $0x8] sm:$0xff]
  %v30 = vld [vmem:[%s0 + $0x10] sm:$0xff]
  %v31 = vld [vmem:[%s0 + $0x18] sm:$0xff]
  %v32 = vld [vmem:[%s0 + $0x20] sm:$0xff]
  %v33 = vld [vmem:[%s0 + $0x28] sm:$0xff]
  %v34 = vld [vmem:[%s0 + $0x30] sm:$0xff]
  %v35 = vld [vmem:[%s0 + $0x38] sm:$0xff]
  %v36 = vld [vmem:[%s0 + $0x40] sm:$0xff]
  %v37 = vld [vmem:[%s0 + $0x48] sm:$0xff]
  %v38 = vld [vmem:[%s0 + $0x50] sm:$0xff]
  %v39 = vld [vmem:[%s0 + $0x58] sm:$0xff]
  %v40 = vld [vmem:[%s0 + $0x60] sm:$0xff]
  %v41 = vld [vmem:[%s1] sm:$0xff]
  %v42 = vld [vmem:[%s1 + $0x8] sm:$0xff]
  %v43 = vld [vmem:[%s1 + $0x10] sm:$0xff]
  %v44 = vld [vmem:[%s1 + $0x18] sm:$0xff]
  %v45 = vld [vmem:[%s1 + $0x20] sm:$0xff]
  %v46 = vld [vmem:[%s1 + $0x28] sm:$0xff]
  %v47 = vld [vmem:[%s1 + $0x30] sm:$0xff]
  %v48 = vld [vmem:[%s1 + $0x38] sm:$0xff]
  %v49 = vld [vmem:[%s2] sm:$0x1]
  %v51 = vperm.slane %v49, 0
  %vm53 = vcmask 523264
  %v55 = vsel %vm53, %v28, 0
  %v58 = vsel %vm53, %v29, 0
  %v61 = vsel %vm53, %v30, 0
  %v64 = vsel %vm53, %v31, 0
  %v67 = vsel %vm53, %v32, 0
  %v70 = vsel %vm53, %v33, 0
  %v73 = vsel %vm53, %v34, 0
  %v76 = vsel %vm53, %v35, 0
  %v79 = vsel %vm53, %v36, 0
  %v82 = vsel %vm53, %v37, 0
  %v85 = vsel %vm53, %v38, 0
  %v88 = vsel %vm53, %v39, 0
  %v91 = vsel %vm53, %v40, 0
  %93 = vmatpush.msra.mxu0 0.0
  %94 = vmatpush.msra.mxu0 0.0
  %95 = vmatpush.msra.mxu0 0.0
  %96 = vmatpush.msra.mxu0 0.0
  %97 = vmatpush.msra.mxu0 0.0
  %98 = vmatpush.msra.mxu0 0.0
  %99 = vmatpush.msra.mxu0 0.0
  %100 = vmatpush.msra.mxu0 0.0
  %101 = vmatpush.msra.mxu0 %v48
  %102 = vmatpush.msra.mxu0 %v47
  %103 = vmatpush.msra.mxu0 %v46
  %104 = vmatpush.msra.mxu0 %v45
  %105 = vmatpush.msra.mxu0 %v44
  %106 = vmatpush.msra.mxu0 %v43
  %107 = vmatpush.msra.mxu0 %v42
  %108 = vmatpush.msra.mxu0 %v41
  %109 = vmatmul.f32.gmra.mxu0 %v55
  %v110 = vpop.f32.mrf.mxu0
  %v111 = vadd.f32 %v51, %v110
  %112 = vmatmul.f32.gmra.mxu0 %v58
  %v113 = vpop.f32.mrf.mxu0
  %v114 = vadd.f32 %v51, %v113
  %115 = vmatmul.f32.gmra.mxu0 %v61
  %v116 = vpop.f32.mrf.mxu0
  %v117 = vadd.f32 %v51, %v116
  %118 = vmatmul.f32.gmra.mxu0 %v64
  %v119 = vpop.f32.mrf.mxu0
  %v120 = vadd.f32 %v51, %v119
  %121 = vmatmul.f32.gmra.mxu0 %v67
  %v122 = vpop.f32.mrf.mxu0
  %v123 = vadd.f32 %v51, %v122
  %124 = vmatmul.f32.gmra.mxu0 %v70
  %v125 = vpop.f32.mrf.mxu0
  %v126 = vadd.f32 %v51, %v125
  %127 = vmatmul.f32.gmra.mxu0 %v73
  %v128 = vpop.f32.mrf.mxu0
  %v129 = vadd.f32 %v51, %v128
  %130 = vmatmul.f32.gmra.mxu0 %v76
  %v131 = vpop.f32.mrf.mxu0
  %v132 = vadd.f32 %v51, %v131
  %133 = vmatmul.f32.gmra.mxu0 %v79
  %v134 = vpop.f32.mrf.mxu0
  %v135 = vadd.f32 %v51, %v134
  %136 = vmatmul.f32.gmra.mxu0 %v82
  %v137 = vpop.f32.mrf.mxu0
  %v138 = vadd.f32 %v51, %v137
  %139 = vmatmul.f32.gmra.mxu0 %v85
  %v140 = vpop.f32.mrf.mxu0
  %v141 = vadd.f32 %v51, %v140
  %142 = vmatmul.f32.gmra.mxu0 %v88
  %v143 = vpop.f32.mrf.mxu0
  %v144 = vadd.f32 %v51, %v143
  %145 = vmatmul.f32.gmra.mxu0 %v91
  %v146 = vpop.f32.mrf.mxu0
  %v147 = vadd.f32 %v51, %v146
  %148 = vdwg.mxu0
  %v149 = vmax.f32 %v111, 0.0
  %v150 = vmax.f32 %v114, 0.0
  %v151 = vmax.f32 %v117, 0.0
  %v152 = vmax.f32 %v120, 0.0
  %v153 = vmax.f32 %v123, 0.0
  %v154 = vmax.f32 %v126, 0.0
  %v155 = vmax.f32 %v129, 0.0
  %v156 = vmax.f32 %v132, 0.0
  %v157 = vmax.f32 %v135, 0.0
  %v158 = vmax.f32 %v138, 0.0
  %v159 = vmax.f32 %v141, 0.0
  %v160 = vmax.f32 %v144, 0.0
  %v161 = vmax.f32 %v147, 0.0
  %vm162 = vcmask 261120
  %v163 = vsel %vm162, %v149, 0.0
  %v164 = vsel %vm162, %v150, 0.0
  %v165 = vadd.f32 %v163, %v164
  %v166 = vsel %vm162, %v151, 0.0
  %v167 = vadd.f32 %v165, %v166
  %v168 = vsel %vm162, %v152, 0.0
  %v169 = vadd.f32 %v167, %v168
  %v170 = vsel %vm162, %v153, 0.0
  %v171 = vadd.f32 %v169, %v170
  %v172 = vsel %vm162, %v154, 0.0
  %v173 = vadd.f32 %v171, %v172
  %v174 = vsel %vm162, %v155, 0.0
  %v175 = vadd.f32 %v173, %v174
  %v176 = vsel %vm162, %v156, 0.0
  %v177 = vadd.f32 %v175, %v176
  %v178 = vsel %vm162, %v157, 0.0
  %v179 = vadd.f32 %v177, %v178
  %v180 = vsel %vm162, %v158, 0.0
  %v181 = vadd.f32 %v179, %v180
  %v182 = vsel %vm162, %v159, 0.0
  %v183 = vadd.f32 %v181, %v182
  %v184 = vsel %vm162, %v160, 0.0
  %v185 = vadd.f32 %v183, %v184
  %v186 = vsel %vm162, %v161, 0.0
  %v187 = vadd.f32 %v185, %v186
  %v188 = vrot.slane %v187, 4
  %v189 = vadd.f32 %v187, %v188
  %v190 = vrot.slane %v189, 2
  %v191 = vadd.f32 %v189, %v190
  %v192 = vrot.slane %v191, 1
  %v193 = vadd.f32 %v191, %v192
  %v194 = vmul.f32 %v149, %v149
  %v195 = vmul.f32 %v150, %v150
  %v196 = vmul.f32 %v151, %v151
  %v197 = vmul.f32 %v152, %v152
  %v198 = vmul.f32 %v153, %v153
  %v199 = vmul.f32 %v154, %v154
  %v200 = vmul.f32 %v155, %v155
  %v201 = vmul.f32 %v156, %v156
  %v202 = vmul.f32 %v157, %v157
  %v203 = vmul.f32 %v158, %v158
  %v204 = vmul.f32 %v159, %v159
  %v205 = vmul.f32 %v160, %v160
  %v206 = vmul.f32 %v161, %v161
  %v207 = vsel %vm162, %v194, 0.0
  %v208 = vsel %vm162, %v195, 0.0
  %v209 = vadd.f32 %v207, %v208
  %v210 = vsel %vm162, %v196, 0.0
  %v211 = vadd.f32 %v209, %v210
  %v212 = vsel %vm162, %v197, 0.0
  %v213 = vadd.f32 %v211, %v212
  %v214 = vsel %vm162, %v198, 0.0
  %v215 = vadd.f32 %v213, %v214
  %v216 = vsel %vm162, %v199, 0.0
  %v217 = vadd.f32 %v215, %v216
  %v218 = vsel %vm162, %v200, 0.0
  %v219 = vadd.f32 %v217, %v218
  %v220 = vsel %vm162, %v201, 0.0
  %v221 = vadd.f32 %v219, %v220
  %v222 = vsel %vm162, %v202, 0.0
  %v223 = vadd.f32 %v221, %v222
  %v224 = vsel %vm162, %v203, 0.0
  %v225 = vadd.f32 %v223, %v224
  %v226 = vsel %vm162, %v204, 0.0
  %v227 = vadd.f32 %v225, %v226
  %v228 = vsel %vm162, %v205, 0.0
  %v229 = vadd.f32 %v227, %v228
  %v230 = vsel %vm162, %v206, 0.0
  %v231 = vadd.f32 %v229, %v230
  %v232 = vrot.slane %v231, 4
  %v233 = vadd.f32 %v231, %v232
  %v234 = vrot.slane %v233, 2
  %v235 = vadd.f32 %v233, %v234
  %v236 = vrot.slane %v235, 1
  %v237 = vadd.f32 %v235, %v236
  %v238 = vmax.f32 %v49, 0.0
  %v239 = vmul.f32 %v238, 4.0
  %v240 = vsub.f32 %v193, %v239
  %v241 = vmul.f32 %v238, %v238
  %v242 = vmul.f32 %v241, 4.0
  %v243 = vsub.f32 %v237, %v242
  %v244 = vmul.f32 %v240, 0.01
  %v245 = vmul.f32 %v243, 0.01
  %v246 = vmul.f32 %v244, %v244
  %v247 = vsub.f32 %v245, %v246
  %v248 = vmax.f32 %v247, 0.0
  %v249 = vadd.f32 %v248, 1e-05
  %v250 = vrsqrt.pop %v249
  %v251 = vmul.f32 %v250, %v249
  %v252 = vmul.f32 %v251, %v250
  %v253 = vmul.f32 0.5, %v252
  %v254 = vsub.f32 1.5, %v253
  %v255 = vmul.f32 %v250, %v254
  %vm256 = vweird.f32 %v249
  %vm257 = vweird.f32 %v250
  %vm258 = vmor %vm256, %vm257
  %v259 = vsel %vm258, %v250, %v255
  %v260 = vld [vmem:[%s3] sm:$0x1]
  %v261 = vmul.f32 %v260, %v259
  %v262 = vld [vmem:[%s4] sm:$0x1]
  %v263 = vmul.f32 %v244, %v261
  %v264 = vsub.f32 %v262, %v263
  %v265 = vld [vmem:[%s5] sm:$0x1]
  %v266 = vmul.f32 %v265, %v261
  %v267 = vmul.f32 %v264, %v265
  %vm268 = vcmask 253952
  %v269 = vsel %vm268, %v267, 0.0
  %270 = vadd.xlane.f32.xlu0 %v269
  %v271 = vpop.xlane.xlu0 %270
  %v272 = vld [vmem:[#allocation2] sm:$0x1]
  %v273 = vadd.f32 %v271, %v272
  %v275 = vperm.slane %v266, 0
  %v277 = vmul.f32 %v149, %v275
  %v278 = vmul.f32 %v150, %v275
  %v279 = vmul.f32 %v151, %v275
  %v280 = vmul.f32 %v152, %v275
  %v281 = vmul.f32 %v153, %v275
  %v282 = vmul.f32 %v154, %v275
  %v283 = vmul.f32 %v155, %v275
  %v284 = vmul.f32 %v156, %v275
  %v285 = vmul.f32 %v157, %v275
  %v286 = vmul.f32 %v158, %v275
  %v287 = vmul.f32 %v159, %v275
  %v288 = vmul.f32 %v160, %v275
  %v289 = vmul.f32 %v161, %v275
  %v290 = vsel %vm162, %v277, 0.0
  %291 = vadd.xlane.f32.xlu0 %v290
  %v292 = vpop.xlane.xlu0 %291
  %v293 = vsel %vm162, %v278, 0.0
  %294 = vadd.xlane.f32.xlu0 %v293
  %v295 = vpop.xlane.xlu0 %294
  %v296 = vsel %vm162, %v279, 0.0
  %297 = vadd.xlane.f32.xlu0 %v296
  %v298 = vpop.xlane.xlu0 %297
  %v299 = vsel %vm162, %v280, 0.0
  %300 = vadd.xlane.f32.xlu0 %v299
  %v301 = vpop.xlane.xlu0 %300
  %v302 = vsel %vm162, %v281, 0.0
  %303 = vadd.xlane.f32.xlu0 %v302
  %v304 = vpop.xlane.xlu0 %303
  %v305 = vsel %vm162, %v282, 0.0
  %306 = vadd.xlane.f32.xlu0 %v305
  %v307 = vpop.xlane.xlu0 %306
  %v308 = vsel %vm162, %v283, 0.0
  %309 = vadd.xlane.f32.xlu0 %v308
  %v310 = vpop.xlane.xlu0 %309
  %v311 = vsel %vm162, %v284, 0.0
  %312 = vadd.xlane.f32.xlu0 %v311
  %v313 = vpop.xlane.xlu0 %312
  %v314 = vsel %vm162, %v285, 0.0
  %315 = vadd.xlane.f32.xlu0 %v314
  %v316 = vpop.xlane.xlu0 %315
  %v317 = vsel %vm162, %v286, 0.0
  %318 = vadd.xlane.f32.xlu0 %v317
  %v319 = vpop.xlane.xlu0 %318
  %v320 = vsel %vm162, %v287, 0.0
  %321 = vadd.xlane.f32.xlu0 %v320
  %v322 = vpop.xlane.xlu0 %321
  %v323 = vsel %vm162, %v288, 0.0
  %324 = vadd.xlane.f32.xlu0 %v323
  %v325 = vpop.xlane.xlu0 %324
  %v326 = vsel %vm162, %v289, 0.0
  %327 = vadd.xlane.f32.xlu0 %v326
  %v328 = vpop.xlane.xlu0 %327
  %v329 = vperm.slane %v273, 0
  %v330 = vadd.f32 %v292, %v329
  %v331 = vadd.f32 %v295, %v329
  %v332 = vadd.f32 %v298, %v329
  %v333 = vadd.f32 %v301, %v329
  %v334 = vadd.f32 %v304, %v329
  %v335 = vadd.f32 %v307, %v329
  %v336 = vadd.f32 %v310, %v329
  %v337 = vadd.f32 %v313, %v329
  %v338 = vadd.f32 %v316, %v329
  %v339 = vadd.f32 %v319, %v329
  %v340 = vadd.f32 %v322, %v329
  %v341 = vadd.f32 %v325, %v329
  %v342 = vadd.f32 %v328, %v329
  %v343 = vsub.f32 0.0, %v330
  %v344 = vsub.f32 0.0, %v331
  %v345 = vsub.f32 0.0, %v332
  %v346 = vsub.f32 0.0, %v333
  %v347 = vsub.f32 0.0, %v334
  %v348 = vsub.f32 0.0, %v335
  %v349 = vsub.f32 0.0, %v336
  %v350 = vsub.f32 0.0, %v337
  %v351 = vsub.f32 0.0, %v338
  %v352 = vsub.f32 0.0, %v339
  %v353 = vsub.f32 0.0, %v340
  %v354 = vsub.f32 0.0, %v341
  %v355 = vsub.f32 0.0, %v342
  %v356 = vmul.f32 %v343, 1.442695
  %v357 = vpow.pop %v356
  %v358 = vmul.f32 %v344, 1.442695
  %v359 = vpow.pop %v358
  %v360 = vmul.f32 %v345, 1.442695
  %v361 = vpow.pop %v360
  %v362 = vmul.f32 %v346, 1.442695
  %v363 = vpow.pop %v362
  %v364 = vmul.f32 %v347, 1.442695
  %v365 = vpow.pop %v364
  %v366 = vmul.f32 %v348, 1.442695
  %v367 = vpow.pop %v366
  %v368 = vmul.f32 %v349, 1.442695
  %v369 = vpow.pop %v368
  %v370 = vmul.f32 %v350, 1.442695
  %v371 = vpow.pop %v370
  %v372 = vmul.f32 %v351, 1.442695
  %v373 = vpow.pop %v372
  %v374 = vmul.f32 %v352, 1.442695
  %v375 = vpow.pop %v374
  %v376 = vmul.f32 %v353, 1.442695
  %v377 = vpow.pop %v376
  %v378 = vmul.f32 %v354, 1.442695
  %v379 = vpow.pop %v378
  %v380 = vmul.f32 %v355, 1.442695
  %v381 = vpow.pop %v380
  %v382 = vadd.f32 %v357, 1.0
  %v383 = vadd.f32 %v359, 1.0
  %v384 = vadd.f32 %v361, 1.0
  %v385 = vadd.f32 %v363, 1.0
  %v386 = vadd.f32 %v365, 1.0
  %v387 = vadd.f32 %v367, 1.0
  %v388 = vadd.f32 %v369, 1.0
  %v389 = vadd.f32 %v371, 1.0
  %v390 = vadd.f32 %v373, 1.0
  %v391 = vadd.f32 %v375, 1.0
  %v392 = vadd.f32 %v377, 1.0
  %v393 = vadd.f32 %v379, 1.0
  %v394 = vadd.f32 %v381, 1.0
  %v395 = vrcp.pop %v382
  %v396 = vmul.f32 %v382, %v395
  %v397 = vsub.f32 1.0, %v396
  %v398 = vmul.f32 %v395, %v397
  %v399 = vadd.f32 %v395, %v398
  %vm400 = vweird.f32 %v382
  %vm401 = vweird.f32 %v395
  %vm402 = vmor %vm400, %vm401
  %v403 = vsel %vm402, %v395, %v399
  %v404 = vand.u32 2147483647, %v382
  %vm405 = vcmp.eq.f32.partialorder %v404, 8.507059e+37
  %v406 = vand.u32 %v382, 2147483648
  %v407 = vor.u32 1.1754944e-38, %v406
  %v408 = vsel %vm405, %v407, %v403
  %v409 = vrcp.pop %v383
  %v410 = vmul.f32 %v383, %v409
  %v411 = vsub.f32 1.0, %v410
  %v412 = vmul.f32 %v409, %v411
  %v413 = vadd.f32 %v409, %v412
  %vm414 = vweird.f32 %v383
  %vm415 = vweird.f32 %v409
  %vm416 = vmor %vm414, %vm415
  %v417 = vsel %vm416, %v409, %v413
  %v418 = vand.u32 2147483647, %v383
  %vm419 = vcmp.eq.f32.partialorder %v418, 8.507059e+37
  %v420 = vand.u32 %v383, 2147483648
  %v421 = vor.u32 1.1754944e-38, %v420
  %v422 = vsel %vm419, %v421, %v417
  %v423 = vrcp.pop %v384
  %v424 = vmul.f32 %v384, %v423
  %v425 = vsub.f32 1.0, %v424
  %v426 = vmul.f32 %v423, %v425
  %v427 = vadd.f32 %v423, %v426
  %vm428 = vweird.f32 %v384
  %vm429 = vweird.f32 %v423
  %vm430 = vmor %vm428, %vm429
  %v431 = vsel %vm430, %v423, %v427
  %v432 = vand.u32 2147483647, %v384
  %vm433 = vcmp.eq.f32.partialorder %v432, 8.507059e+37
  %v434 = vand.u32 %v384, 2147483648
  %v435 = vor.u32 1.1754944e-38, %v434
  %v436 = vsel %vm433, %v435, %v431
  %v437 = vrcp.pop %v385
  %v438 = vmul.f32 %v385, %v437
  %v439 = vsub.f32 1.0, %v438
  %v440 = vmul.f32 %v437, %v439
  %v441 = vadd.f32 %v437, %v440
  %vm442 = vweird.f32 %v385
  %vm443 = vweird.f32 %v437
  %vm444 = vmor %vm442, %vm443
  %v445 = vsel %vm444, %v437, %v441
  %v446 = vand.u32 2147483647, %v385
  %vm447 = vcmp.eq.f32.partialorder %v446, 8.507059e+37
  %v448 = vand.u32 %v385, 2147483648
  %v449 = vor.u32 1.1754944e-38, %v448
  %v450 = vsel %vm447, %v449, %v445
  %v451 = vrcp.pop %v386
  %v452 = vmul.f32 %v386, %v451
  %v453 = vsub.f32 1.0, %v452
  %v454 = vmul.f32 %v451, %v453
  %v455 = vadd.f32 %v451, %v454
  %vm456 = vweird.f32 %v386
  %vm457 = vweird.f32 %v451
  %vm458 = vmor %vm456, %vm457
  %v459 = vsel %vm458, %v451, %v455
  %v460 = vand.u32 2147483647, %v386
  %vm461 = vcmp.eq.f32.partialorder %v460, 8.507059e+37
  %v462 = vand.u32 %v386, 2147483648
  %v463 = vor.u32 1.1754944e-38, %v462
  %v464 = vsel %vm461, %v463, %v459
  %v465 = vrcp.pop %v387
  %v466 = vmul.f32 %v387, %v465
  %v467 = vsub.f32 1.0, %v466
  %v468 = vmul.f32 %v465, %v467
  %v469 = vadd.f32 %v465, %v468
  %vm470 = vweird.f32 %v387
  %vm471 = vweird.f32 %v465
  %vm472 = vmor %vm470, %vm471
  %v473 = vsel %vm472, %v465, %v469
  %v474 = vand.u32 2147483647, %v387
  %vm475 = vcmp.eq.f32.partialorder %v474, 8.507059e+37
  %v476 = vand.u32 %v387, 2147483648
  %v477 = vor.u32 1.1754944e-38, %v476
  %v478 = vsel %vm475, %v477, %v473
  %v479 = vrcp.pop %v388
  %v480 = vmul.f32 %v388, %v479
  %v481 = vsub.f32 1.0, %v480
  %v482 = vmul.f32 %v479, %v481
  %v483 = vadd.f32 %v479, %v482
  %vm484 = vweird.f32 %v388
  %vm485 = vweird.f32 %v479
  %vm486 = vmor %vm484, %vm485
  %v487 = vsel %vm486, %v479, %v483
  %v488 = vand.u32 2147483647, %v388
  %vm489 = vcmp.eq.f32.partialorder %v488, 8.507059e+37
  %v490 = vand.u32 %v388, 2147483648
  %v491 = vor.u32 1.1754944e-38, %v490
  %v492 = vsel %vm489, %v491, %v487
  %v493 = vrcp.pop %v389
  %v494 = vmul.f32 %v389, %v493
  %v495 = vsub.f32 1.0, %v494
  %v496 = vmul.f32 %v493, %v495
  %v497 = vadd.f32 %v493, %v496
  %vm498 = vweird.f32 %v389
  %vm499 = vweird.f32 %v493
  %vm500 = vmor %vm498, %vm499
  %v501 = vsel %vm500, %v493, %v497
  %v502 = vand.u32 2147483647, %v389
  %vm503 = vcmp.eq.f32.partialorder %v502, 8.507059e+37
  %v504 = vand.u32 %v389, 2147483648
  %v505 = vor.u32 1.1754944e-38, %v504
  %v506 = vsel %vm503, %v505, %v501
  %v507 = vrcp.pop %v390
  %v508 = vmul.f32 %v390, %v507
  %v509 = vsub.f32 1.0, %v508
  %v510 = vmul.f32 %v507, %v509
  %v511 = vadd.f32 %v507, %v510
  %vm512 = vweird.f32 %v390
  %vm513 = vweird.f32 %v507
  %vm514 = vmor %vm512, %vm513
  %v515 = vsel %vm514, %v507, %v511
  %v516 = vand.u32 2147483647, %v390
  %vm517 = vcmp.eq.f32.partialorder %v516, 8.507059e+37
  %v518 = vand.u32 %v390, 2147483648
  %v519 = vor.u32 1.1754944e-38, %v518
  %v520 = vsel %vm517, %v519, %v515
  %v521 = vrcp.pop %v391
  %v522 = vmul.f32 %v391, %v521
  %v523 = vsub.f32 1.0, %v522
  %v524 = vmul.f32 %v521, %v523
  %v525 = vadd.f32 %v521, %v524
  %vm526 = vweird.f32 %v391
  %vm527 = vweird.f32 %v521
  %vm528 = vmor %vm526, %vm527
  %v529 = vsel %vm528, %v521, %v525
  %v530 = vand.u32 2147483647, %v391
  %vm531 = vcmp.eq.f32.partialorder %v530, 8.507059e+37
  %v532 = vand.u32 %v391, 2147483648
  %v533 = vor.u32 1.1754944e-38, %v532
  %v534 = vsel %vm531, %v533, %v529
  %v535 = vrcp.pop %v392
  %v536 = vmul.f32 %v392, %v535
  %v537 = vsub.f32 1.0, %v536
  %v538 = vmul.f32 %v535, %v537
  %v539 = vadd.f32 %v535, %v538
  %vm540 = vweird.f32 %v392
  %vm541 = vweird.f32 %v535
  %vm542 = vmor %vm540, %vm541
  %v543 = vsel %vm542, %v535, %v539
  %v544 = vand.u32 2147483647, %v392
  %vm545 = vcmp.eq.f32.partialorder %v544, 8.507059e+37
  %v546 = vand.u32 %v392, 2147483648
  %v547 = vor.u32 1.1754944e-38, %v546
  %v548 = vsel %vm545, %v547, %v543
  %v549 = vrcp.pop %v393
  %v550 = vmul.f32 %v393, %v549
  %v551 = vsub.f32 1.0, %v550
  %v552 = vmul.f32 %v549, %v551
  %v553 = vadd.f32 %v549, %v552
  %vm554 = vweird.f32 %v393
  %vm555 = vweird.f32 %v549
  %vm556 = vmor %vm554, %vm555
  %v557 = vsel %vm556, %v549, %v553
  %v558 = vand.u32 2147483647, %v393
  %vm559 = vcmp.eq.f32.partialorder %v558, 8.507059e+37
  %v560 = vand.u32 %v393, 2147483648
  %v561 = vor.u32 1.1754944e-38, %v560
  %v562 = vsel %vm559, %v561, %v557
  %v563 = vrcp.pop %v394
  %v564 = vmul.f32 %v394, %v563
  %v565 = vsub.f32 1.0, %v564
  %v566 = vmul.f32 %v563, %v565
  %v567 = vadd.f32 %v563, %v566
  %vm568 = vweird.f32 %v394
  %vm569 = vweird.f32 %v563
  %vm570 = vmor %vm568, %vm569
  %v571 = vsel %vm570, %v563, %v567
  %v572 = vand.u32 2147483647, %v394
  %vm573 = vcmp.eq.f32.partialorder %v572, 8.507059e+37
  %v574 = vand.u32 %v394, 2147483648
  %v575 = vor.u32 1.1754944e-38, %v574
  %v576 = vsel %vm573, %v575, %v571
  %vm577 = vcmask 7168
  %578 = vst.msk [vmem:[%s7] sm:$0xff] %vm577, %v408
  %579 = vst.msk [vmem:[%s7 + $0x8] sm:$0xff] %vm577, %v422
  %580 = vst.msk [vmem:[%s7 + $0x10] sm:$0xff] %vm577, %v436
  %581 = vst.msk [vmem:[%s7 + $0x18] sm:$0xff] %vm577, %v450
  %582 = vst.msk [vmem:[%s7 + $0x20] sm:$0xff] %vm577, %v464
  %583 = vst.msk [vmem:[%s7 + $0x28] sm:$0xff] %vm577, %v478
  %584 = vst.msk [vmem:[%s7 + $0x30] sm:$0xff] %vm577, %v492
  %585 = vst.msk [vmem:[%s7 + $0x38] sm:$0xff] %vm577, %v506
  %586 = vst.msk [vmem:[%s7 + $0x40] sm:$0xff] %vm577, %v520
  %587 = vst.msk [vmem:[%s7 + $0x48] sm:$0xff] %vm577, %v534
  %588 = vst.msk [vmem:[%s7 + $0x50] sm:$0xff] %vm577, %v548
  %589 = vst.msk [vmem:[%s7 + $0x58] sm:$0xff] %vm577, %v562
  %590 = vst.msk [vmem:[%s7 + $0x60] sm:$0xff] %vm577, %v576
  // Predicated region
  $region30: #{tpu_custom_call.1} parent=0 // pred_check
    _
  $region31: #{tpu_custom_call.1} parent=0 // pred_check_branch
    %592 = sbr.rel (0) target = $region33
  $region32: #{tpu_custom_call.1} parent=0 // pred_region
    _
  $region33: #{tpu_custom_call.1} parent=0 // pred_fallthru
    _
  // Predicated region
  $region34: #{tpu_custom_call.1} parent=0 // pred_check
    _
  $region35: #{tpu_custom_call.1} parent=0 // pred_check_branch
    %594 = sbr.rel (0) target = $region37
  $region36: #{tpu_custom_call.1} parent=0 // pred_region
    _
  $region37: #{tpu_custom_call.1} parent=0 // pred_fallthru
    _

</llo_original>
